<compile_context>
chip_gen: v7x
topology: tpu7x:2x2x1
jax: 0.10.0
libtpu: 0.0.40
codegen_flags: <defaults>
</compile_context>

<pallas_src>
import functools

import jax
import jax.numpy as jnp
from jax.experimental import pallas as pl
from jax.experimental.pallas import tpu as pltpu

EPS = 1e-5


def _pick_tile(n, target):
    """Largest multiple of 128 that divides n and is <= target, else n itself."""
    best = None
    t = 128
    while t <= min(n, target):
        if n % t == 0:
            best = t
        t += 128
    return best if best is not None else n


def _vmem_limit_bytes():
    # Raise the scoped-VMEM limit above the small defaults (16 MiB v5e,
    # 32 MiB v6e/v7x) while leaving headroom (v7x only has 64 MiB physical).
    try:
        phys = int(pltpu.get_tpu_info().vmem_capacity_bytes)
        return int(min(phys * 3 // 4, 112 * 1024 * 1024))
    except Exception:
        return 48 * 1024 * 1024


def _spec(block_shape, index_map, *, buffers=None):
    """BlockSpec helper; buffers=1 single-buffers blocks whose index is ~constant."""
    if buffers is not None and hasattr(pl, "Buffered"):
        try:
            return pl.BlockSpec(block_shape, index_map,
                                pipeline_mode=pl.Buffered(buffers))
        except (TypeError, ValueError):
            pass
    return pl.BlockSpec(block_shape, index_map)


def _choose_block_m(c, n, out_bytes, vmem_limit):
    """Largest attention m-tile whose working set fits the scoped VMEM budget."""
    budget = int(vmem_limit * 0.8)
    # resident: g bf16 (single buffer) + f32 scratch accumulator + output block
    resident = c * n * (2 + 4 + out_bytes)
    for cand in (512, 256, 128):
        tm = _pick_tile(n, cand)
        work = tm * n * (4 + 4 + 2)          # logits f32 + p f32 + p bf16
        edges = 8 * c * tm                   # f,h bf16 tiles, double-buffered
        if resident + work + edges <= budget:
            return tm
    # TODO(synk): for very large N on v7x (64 MiB VMEM) switch the attention
    # kernel to an online-softmax n-tiling so nothing scales with full N.
    return _pick_tile(n, 128)


# --------------------------------------------------------------------------
# Kernel 1: per-(batch, channel) spatial moments (mean, rstd) of f_c and f_s.
# Chan/Welford tile-combine: numerically robust vs. E[x^2] - mean^2.
# --------------------------------------------------------------------------
def _moments_kernel(fc_ref, fs_ref, mu_c_ref, m2_c_ref, mu_s_ref, m2_s_ref,
                    *, n_total, tile_n):
    nj = pl.program_id(1)

    @pl.when(nj == 0)
    def _init():
        mu_c_ref[...] = jnp.zeros_like(mu_c_ref)
        m2_c_ref[...] = jnp.zeros_like(m2_c_ref)
        mu_s_ref[...] = jnp.zeros_like(mu_s_ref)
        m2_s_ref[...] = jnp.zeros_like(m2_s_ref)

    # Combine weights for merging the running stats with this tile's stats:
    #   prev_count = nj * tile_n, tile_count = tile_n
    step = nj.astype(jnp.float32)
    w_mean = 1.0 / (step + 1.0)                       # tile_n / new_count
    w_m2 = float(tile_n) * step / (step + 1.0)        # prev*tile / new_count

    def update(x_ref, mu_ref, m2_ref):
        x = x_ref[0].astype(jnp.float32)                      # (C, TN)
        t_mean = jnp.mean(x, axis=-1, keepdims=True)          # (C, 1)
        d = x - t_mean
        t_m2 = jnp.sum(d * d, axis=-1, keepdims=True)         # (C, 1)
        delta = t_mean - mu_ref[0]
        mu_ref[0] += delta * w_mean
        m2_ref[0] += t_m2 + delta * delta * w_m2

    update(fc_ref, mu_c_ref, m2_c_ref)
    update(fs_ref, mu_s_ref, m2_s_ref)

    @pl.when(nj == pl.num_programs(1) - 1)
    def _finalize():
        denom = float(max(n_total - 1, 1))     # unbiased variance; guard N == 1
        for m2_ref in (m2_c_ref, m2_s_ref):
            var = m2_ref[0] / denom
            m2_ref[0] = jax.lax.rsqrt(var + EPS)


def _compute_moments(fc3, fs3, tn, vmem_limit):
    b, c, n = fc3.shape
    feat_spec = pl.BlockSpec((1, c, tn), lambda bi, nj: (bi, 0, nj))
    stat_spec = pl.BlockSpec((1, c, 1), lambda bi, nj: (bi, 0, 0))
    stat_shape = jax.ShapeDtypeStruct((b, c, 1), jnp.float32)

    return pl.pallas_call(
        functools.partial(_moments_kernel, n_total=n, tile_n=tn),
        out_shape=(stat_shape,) * 4,
        grid_spec=pltpu.PrefetchScalarGridSpec(
            num_scalar_prefetch=0,
            grid=(b, n // tn),
            in_specs=[feat_spec, feat_spec],
            out_specs=[stat_spec] * 4,
        ),
        compiler_params=pltpu.CompilerParams(
            dimension_semantics=("parallel", "arbitrary"),
            vmem_limit_bytes=vmem_limit),
    )(fc3, fs3)


# --------------------------------------------------------------------------
# Kernel 2: the three 1x1 convs (channel-mixing matmuls) on spatial tiles.
# Weights arrive pre-cast to bf16; biases stay f32.  Normalization is done in
# f32 on the VPU, then operands drop to bf16 for single-pass MXU matmuls.
# TODO(synk): optionally fold the normalization into per-batch conv weights
# (w' = w.diag(rstd), b' = b - w.(mean*rstd)) to remove the VPU passes.
# --------------------------------------------------------------------------
def _projection_kernel(fc_ref, fs_ref, mu_c_ref, rs_c_ref, mu_s_ref, rs_s_ref,
                       w1_ref, b1_ref, w2_ref, b2_ref, w3_ref, b3_ref,
                       f_ref, g_ref, h_ref):
    fc = fc_ref[0].astype(jnp.float32)                       # (C, TN)
    fs = fs_ref[0].astype(jnp.float32)

    # normalize_cw (assumed): per-channel mean/std over the spatial axis.
    fcn = ((fc - mu_c_ref[0]) * rs_c_ref[0]).astype(jnp.bfloat16)
    fsn = ((fs - mu_s_ref[0]) * rs_s_ref[0]).astype(jnp.bfloat16)
    fsb = fs_ref[0].astype(jnp.bfloat16)                     # raw f_s for conv3

    f = jnp.dot(w1_ref[...], fcn, preferred_element_type=jnp.float32) + b1_ref[...]
    g = jnp.dot(w2_ref[...], fsn, preferred_element_type=jnp.float32) + b2_ref[...]
    h = jnp.dot(w3_ref[...], fsb, preferred_element_type=jnp.float32) + b3_ref[...]

    f_ref[0] = f.astype(f_ref.dtype)
    g_ref[0] = g.astype(g_ref.dtype)
    h_ref[0] = h.astype(h_ref.dtype)


def _project(fc3, fs3, stats, weights, tn, vmem_limit):
    b, c, n = fc3.shape
    mu_c, rs_c, mu_s, rs_s = stats
    w1, b1, w2, b2, w3, b3 = weights

    feat_in_spec = pl.BlockSpec((1, c, tn), lambda bi, nj: (bi, 0, nj))
    stat_spec = _spec((1, c, 1), lambda bi, nj: (bi, 0, 0), buffers=1)
    w_spec = _spec((c, c), lambda bi, nj: (0, 0), buffers=1)
    b_spec = _spec((c, 1), lambda bi, nj: (0, 0), buffers=1)
    feat_out_spec = pl.BlockSpec((1, c, tn), lambda bi, nj: (bi, 0, nj))
    feat_out_shape = jax.ShapeDtypeStruct((b, c, n), jnp.bfloat16)

    return pl.pallas_call(
        _projection_kernel,
        out_shape=(feat_out_shape,) * 3,
        grid_spec=pltpu.PrefetchScalarGridSpec(
            num_scalar_prefetch=0,
            grid=(b, n // tn),
            in_specs=[feat_in_spec, feat_in_spec,
                      stat_spec, stat_spec, stat_spec, stat_spec,
                      w_spec, b_spec, w_spec, b_spec, w_spec, b_spec],
            out_specs=[feat_out_spec] * 3,
        ),
        compiler_params=pltpu.CompilerParams(
            dimension_semantics=("parallel", "parallel"),
            vmem_limit_bytes=vmem_limit),
    )(fc3, fs3, mu_c, rs_c, mu_s, rs_s, w1, b1, w2, b2, w3, b3)


# --------------------------------------------------------------------------
# Kernel 3: tiled attention.  grid = (batch, m-tile); the softmax axis (n) is
# fully resident per step, the contraction axis (m) is tiled and accumulated
# into an f32 VMEM scratch; output is stored once on the last m step.
# TODO(synk): for B=1 on v7x add a second "parallel" split (online softmax over
# n) so both TensorCores contribute.
# --------------------------------------------------------------------------
def _attention_kernel(f_ref, g_ref, h_ref, o_ref, acc_ref):
    mi = pl.program_id(1)

    @pl.when(mi == 0)
    def _init():
        acc_ref[...] = jnp.zeros_like(acc_ref)

    f_t = f_ref[0]                                           # (C, TM) bf16
    g_all = g_ref[0]                                         # (C, N)  bf16
    h_t = h_ref[0]                                           # (C, TM) bf16

    # logits[m, n] = sum_c f[c, m] * g[c, n]: contract the channel axis of both
    # operands directly (transposed-LHS is native on the MXU; no f.T transpose).
    logits = jax.lax.dot_general(
        f_t, g_all,
        dimension_numbers=(((0,), (0,)), ((), ())),
        preferred_element_type=jnp.float32)                  # (TM, N) f32

    # Complete softmax rows (all N columns present).  Row max / row sum are
    # XLU reductions (idle slot) -- no MXU ones-matmul, no f32 MXU traffic.
    row_max = jnp.max(logits, axis=-1, keepdims=True)        # (TM, 1)
    p = jnp.exp(logits - row_max)                            # (TM, N) f32 (EUP)
    row_sum = jnp.sum(p, axis=-1, keepdims=True)             # (TM, 1) XLU
    inv_z = pl.reciprocal(row_sum, approx=True)              # EUP slot

    # Normalize once and drop to bf16: single (TM, N) VPU pass, and the contrib
    # matmul stays single-pass bf16 with f32 accumulation.
    p_bf16 = (p * inv_z).astype(jnp.bfloat16)                # (TM, N) bf16

    acc_ref[...] += jnp.dot(h_t, p_bf16,
                            preferred_element_type=jnp.float32)   # (C, N)

    @pl.when(mi == pl.num_programs(1) - 1)
    def _finalize():
        o_ref[0] = acc_ref[...].astype(o_ref.dtype)


def _attention(f, g, h, out_dtype, tm, vmem_limit):
    b, c, n = f.shape
    feat_m_spec = pl.BlockSpec((1, c, tm), lambda bi, mi: (bi, 0, mi))
    # Resident blocks (constant index across the m axis): single-buffer them to
    # halve their VMEM footprint (matters on v7x's 64 MiB VMEM).
    g_spec = _spec((1, c, n), lambda bi, mi: (bi, 0, 0), buffers=1)
    out_spec = _spec((1, c, n), lambda bi, mi: (bi, 0, 0), buffers=1)

    return pl.pallas_call(
        _attention_kernel,
        out_shape=jax.ShapeDtypeStruct((b, c, n), out_dtype),
        grid_spec=pltpu.PrefetchScalarGridSpec(
            num_scalar_prefetch=0,
            grid=(b, n // tm),
            in_specs=[feat_m_spec, g_spec, feat_m_spec],
            out_specs=out_spec,
            scratch_shapes=[pltpu.VMEM((c, n), jnp.float32)],
        ),
        compiler_params=pltpu.CompilerParams(
            dimension_semantics=("parallel", "arbitrary"),
            vmem_limit_bytes=vmem_limit),
    )(f, g, h)


# --------------------------------------------------------------------------
# Public forward.
# --------------------------------------------------------------------------
def sanet_forward(f_c, f_s, params, *, block_n=512, block_m=None,
                  block_n_moments=2048):
    """f_c, f_s: (B, C, W, H) NCHW. Returns (B, C, W, H) in f_c's dtype."""
    b, c, w, h = f_c.shape
    n = w * h
    # Keep the incoming dtype (bf16 inputs stay bf16): the moments pass is pure
    # HBM-bandwidth bound and both maps are read twice (moments + projection).
    fc3 = f_c.reshape(b, c, n)
    fs3 = f_s.reshape(b, c, n)

    w1, b1, w2, b2, w3, b3 = params
    # Pre-cast conv weights to bf16 once (MXU operand dtype; removes per-step
    # VPU casts inside the projection kernel).  Biases stay f32, shaped (C, 1).
    weights = (w1.astype(jnp.bfloat16), b1.reshape(c, 1).astype(jnp.float32),
               w2.astype(jnp.bfloat16), b2.reshape(c, 1).astype(jnp.float32),
               w3.astype(jnp.bfloat16), b3.reshape(c, 1).astype(jnp.float32))

    vmem_limit = _vmem_limit_bytes()
    tn_mom = _pick_tile(n, block_n_moments)   # big tiles: amortize grid overhead
    tn_proj = _pick_tile(n, block_n)
    out_bytes = jnp.dtype(f_c.dtype).itemsize
    if block_m is None:
        tm = _choose_block_m(c, n, out_bytes, vmem_limit)
    else:
        tm = _pick_tile(n, block_m)

    stats = _compute_moments(fc3, fs3, tn_mom, vmem_limit)
    f, g, hh = _project(fc3, fs3, stats, weights, tn_proj, vmem_limit)
    out = _attention(f, g, hh, f_c.dtype, tm, vmem_limit)    # (B, C, N)
    return out.reshape(b, c, w, h)


# --------------------------------------------------------------------------
# Pure-JAX reference and test harness.
# --------------------------------------------------------------------------
def sanet_reference(f_c, f_s, params):
    b, c, w, h = f_c.shape
    n = w * h
    w1, b1, w2, b2, w3, b3 = params

    def mvn(x):
        mean = jnp.mean(x, axis=-1, keepdims=True)
        var = jnp.var(x, axis=-1, keepdims=True, ddof=1)
        return (x - mean) / jnp.sqrt(var + EPS)

    fc3 = f_c.reshape(b, c, n)
    fs3 = f_s.reshape(b, c, n)
    fcn = mvn(fc3)
    fsn = mvn(fs3)

    f = jnp.einsum("oi,bin->bon", w1, fcn) + b1[None, :, None]
    g = jnp.einsum("oi,bin->bon", w2, fsn) + b2[None, :, None]
    hh = jnp.einsum("oi,bin->bon", w3, fs3) + b3[None, :, None]

    attn = jax.nn.softmax(jnp.einsum("bcm,bcn->bmn", f, g), axis=-1)
    out = jnp.einsum("bcm,bmn->bcn", hh, attn)
    return out.reshape(b, c, w, h)


def init_params(key, channels):
    ks = jax.random.split(key, 6)
    fan_in = channels  # 1x1 conv: fan_in = C_in * 1 * 1
    bound = 1.0 / jnp.sqrt(fan_in)

    def u(k, shape):
        return jax.random.uniform(k, shape, jnp.float32, -bound, bound)

    w1 = u(ks[0], (channels, channels)); b1 = u(ks[1], (channels,))
    w2 = u(ks[2], (channels, channels)); b2 = u(ks[3], (channels,))
    w3 = u(ks[4], (channels, channels)); b3 = u(ks[5], (channels,))
    return (w1, b1, w2, b2, w3, b3)


if __name__ == "__main__":
    key = jax.random.PRNGKey(0)
    k_p, k_c, k_s = jax.random.split(key, 3)

    B, C, W, H = 2, 4, 16, 16
    params = init_params(k_p, C)
    f_c = jax.random.normal(k_c, (B, C, W, H), jnp.float32)
    f_s = jax.random.normal(k_s, (B, C, W, H), jnp.float32)

    # Small blocks so the test exercises the multi-tile Welford combine, the
    # multi-tile projection, and the multi-m-tile attention accumulation
    # (N = 256 -> two 128-wide tiles each).
    out = sanet_forward(f_c, f_s, params,
                        block_n=128, block_m=128, block_n_moments=128)
    out = jax.block_until_ready(out)

    ref = sanet_reference(f_c, f_s, params)
    assert out.shape == (B, C, W, H)
    # bf16 MXU operands + approx reciprocal => relaxed tolerance vs f32 reference.
    max_err = jnp.max(jnp.abs(out - ref))
    assert jnp.allclose(out, ref, rtol=5e-2, atol=5e-2), (
        f"mismatch vs reference (max abs err {max_err})")

    print("KERNEL_OK")
</pallas_src>

<mosaic_0001>
module attributes {stable_mosaic.version = 11 : i64} {
  func.func @_moments_kernel(%arg0: i32, %arg1: i32, %arg2: memref<1x4x128xf32, #tpu.memory_space<vmem>>, %arg3: memref<1x4x128xf32, #tpu.memory_space<vmem>>, %arg4: memref<1x4x1xf32, #tpu.memory_space<vmem>>, %arg5: memref<1x4x1xf32, #tpu.memory_space<vmem>>, %arg6: memref<1x4x1xf32, #tpu.memory_space<vmem>>, %arg7: memref<1x4x1xf32, #tpu.memory_space<vmem>>) attributes {dimension_semantics = [#tpu.dimension_semantics<parallel>, #tpu.dimension_semantics<arbitrary>], iteration_bounds = array<i64: 2, 2>, scalar_prefetch = 0 : i64, scratch_operands = 0 : i64, tpu.core_type = #tpu.core_type<tc>, window_params = [{transform_indices = @transform_0, window_bounds = array<i64: 1, 4, 128>}, {transform_indices = @transform_1, window_bounds = array<i64: 1, 4, 128>}, {transform_indices = @transform_2, window_bounds = array<i64: 1, 4, 1>}, {transform_indices = @transform_3, window_bounds = array<i64: 1, 4, 1>}, {transform_indices = @transform_4, window_bounds = array<i64: 1, 4, 1>}, {transform_indices = @transform_5, window_bounds = array<i64: 1, 4, 1>}]} {
    %c0_i32 = arith.constant 0 : i32
    %0 = arith.cmpi eq, %arg1, %c0_i32 : i32
    %1 = arith.extui %0 : i1 to i32
    %c0_i32_0 = arith.constant 0 : i32
    %2 = arith.cmpi ne, %1, %c0_i32_0 : i32
    scf.if %2 {
      %cst_46 = arith.constant 0.000000e+00 : f32
      %76 = vector.broadcast %cst_46 : f32 to vector<1x4x1xf32>
      %c0_47 = arith.constant 0 : index
      %c0_48 = arith.constant 0 : index
      %c0_49 = arith.constant 0 : index
      %77 = vector.load %arg4[%c0_47, %c0_48, %c0_49] : memref<1x4x1xf32, #tpu.memory_space<vmem>>, vector<1x4x1xf32>
      tpu.vector_store %arg4[%c0_47, %c0_48, %c0_49], %76 {strides = array<i32>} : memref<1x4x1xf32, #tpu.memory_space<vmem>>, vector<1x4x1xf32>,
      %cst_50 = arith.constant 0.000000e+00 : f32
      %78 = vector.broadcast %cst_50 : f32 to vector<1x4x1xf32>
      %c0_51 = arith.constant 0 : index
      %c0_52 = arith.constant 0 : index
      %c0_53 = arith.constant 0 : index
      %79 = vector.load %arg5[%c0_51, %c0_52, %c0_53] : memref<1x4x1xf32, #tpu.memory_space<vmem>>, vector<1x4x1xf32>
      tpu.vector_store %arg5[%c0_51, %c0_52, %c0_53], %78 {strides = array<i32>} : memref<1x4x1xf32, #tpu.memory_space<vmem>>, vector<1x4x1xf32>,
      %cst_54 = arith.constant 0.000000e+00 : f32
      %80 = vector.broadcast %cst_54 : f32 to vector<1x4x1xf32>
      %c0_55 = arith.constant 0 : index
      %c0_56 = arith.constant 0 : index
      %c0_57 = arith.constant 0 : index
      %81 = vector.load %arg6[%c0_55, %c0_56, %c0_57] : memref<1x4x1xf32, #tpu.memory_space<vmem>>, vector<1x4x1xf32>
      tpu.vector_store %arg6[%c0_55, %c0_56, %c0_57], %80 {strides = array<i32>} : memref<1x4x1xf32, #tpu.memory_space<vmem>>, vector<1x4x1xf32>,
      %cst_58 = arith.constant 0.000000e+00 : f32
      %82 = vector.broadcast %cst_58 : f32 to vector<1x4x1xf32>
      %c0_59 = arith.constant 0 : index
      %c0_60 = arith.constant 0 : index
      %c0_61 = arith.constant 0 : index
      %83 = vector.load %arg7[%c0_59, %c0_60, %c0_61] : memref<1x4x1xf32, #tpu.memory_space<vmem>>, vector<1x4x1xf32>
      tpu.vector_store %arg7[%c0_59, %c0_60, %c0_61], %82 {strides = array<i32>} : memref<1x4x1xf32, #tpu.memory_space<vmem>>, vector<1x4x1xf32>,
    } else {
    }
    %3 = arith.sitofp %arg1 : i32 to f32
    %cst = arith.constant 1.000000e+00 : f32
    %4 = arith.addf %3, %cst : f32
    %cst_1 = arith.constant 1.000000e+00 : f32
    %5 = arith.divf %cst_1, %4 : f32
    %cst_2 = arith.constant 1.280000e+02 : f32
    %6 = arith.mulf %cst_2, %3 : f32
    %cst_3 = arith.constant 1.000000e+00 : f32
    %7 = arith.addf %3, %cst_3 : f32
    %8 = arith.divf %6, %7 : f32
    %c0 = arith.constant 0 : index
    %c0_4 = arith.constant 0 : index
    %c0_5 = arith.constant 0 : index
    %9 = vector.load %arg2[%c0, %c0_4, %c0_5] : memref<1x4x128xf32, #tpu.memory_space<vmem>>, vector<1x4x128xf32>
    %10 = vector.shape_cast %9 : vector<1x4x128xf32> to vector<4x128xf32>
    %cst_6 = arith.constant dense<0.000000e+00> : vector<4xf32>
    %11 = vector.multi_reduction <add>, %10, %cst_6 [1] : vector<4x128xf32> to vector<4xf32>
    %12 = vector.shape_cast %11 : vector<4xf32> to vector<4x1xf32>
    %cst_7 = arith.constant 1.280000e+02 : f32
    %13 = vector.broadcast %cst_7 : f32 to vector<4x1xf32>
    %14 = arith.divf %12, %13 : vector<4x1xf32>
    %15 = vector.broadcast %14 : vector<4x1xf32> to vector<4x128xf32>
    %16 = arith.subf %10, %15 : vector<4x128xf32>
    %17 = arith.mulf %16, %16 : vector<4x128xf32>
    %cst_8 = arith.constant dense<0.000000e+00> : vector<4xf32>
    %18 = vector.multi_reduction <add>, %17, %cst_8 [1] : vector<4x128xf32> to vector<4xf32>
    %19 = vector.shape_cast %18 : vector<4xf32> to vector<4x1xf32>
    %c0_9 = arith.constant 0 : index
    %c0_10 = arith.constant 0 : index
    %c0_11 = arith.constant 0 : index
    %20 = vector.load %arg4[%c0_9, %c0_10, %c0_11] : memref<1x4x1xf32, #tpu.memory_space<vmem>>, vector<1x4x1xf32>
    %21 = vector.shape_cast %20 : vector<1x4x1xf32> to vector<4x1xf32>
    %22 = arith.subf %14, %21 : vector<4x1xf32>
    %c0_12 = arith.constant 0 : index
    %c0_13 = arith.constant 0 : index
    %c0_14 = arith.constant 0 : index
    %23 = vector.load %arg4[%c0_12, %c0_13, %c0_14] : memref<1x4x1xf32, #tpu.memory_space<vmem>>, vector<1x4x1xf32>
    %24 = vector.shape_cast %23 : vector<1x4x1xf32> to vector<4x1xf32>
    %25 = vector.broadcast %5 : f32 to vector<4x1xf32>
    %26 = arith.mulf %22, %25 : vector<4x1xf32>
    %27 = arith.addf %24, %26 : vector<4x1xf32>
    %c0_15 = arith.constant 0 : index
    %c0_16 = arith.constant 0 : index
    %c0_17 = arith.constant 0 : index
    %28 = vector.load %arg4[%c0_15, %c0_16, %c0_17] : memref<1x4x1xf32, #tpu.memory_space<vmem>>, vector<1x4x1xf32>
    %29 = vector.shape_cast %28 : vector<1x4x1xf32> to vector<4x1xf32>
    %30 = vector.shape_cast %27 : vector<4x1xf32> to vector<1x4x1xf32>
    tpu.vector_store %arg4[%c0_15, %c0_16, %c0_17], %30 {strides = array<i32>} : memref<1x4x1xf32, #tpu.memory_space<vmem>>, vector<1x4x1xf32>,
    %c0_18 = arith.constant 0 : index
    %c0_19 = arith.constant 0 : index
    %c0_20 = arith.constant 0 : index
    %31 = vector.load %arg5[%c0_18, %c0_19, %c0_20] : memref<1x4x1xf32, #tpu.memory_space<vmem>>, vector<1x4x1xf32>
    %32 = vector.shape_cast %31 : vector<1x4x1xf32> to vector<4x1xf32>
    %33 = arith.mulf %22, %22 : vector<4x1xf32>
    %34 = vector.broadcast %8 : f32 to vector<4x1xf32>
    %35 = arith.mulf %33, %34 : vector<4x1xf32>
    %36 = arith.addf %19, %35 : vector<4x1xf32>
    %37 = arith.addf %32, %36 : vector<4x1xf32>
    %c0_21 = arith.constant 0 : index
    %c0_22 = arith.constant 0 : index
    %c0_23 = arith.constant 0 : index
    %38 = vector.load %arg5[%c0_21, %c0_22, %c0_23] : memref<1x4x1xf32, #tpu.memory_space<vmem>>, vector<1x4x1xf32>
    %39 = vector.shape_cast %38 : vector<1x4x1xf32> to vector<4x1xf32>
    %40 = vector.shape_cast %37 : vector<4x1xf32> to vector<1x4x1xf32>
    tpu.vector_store %arg5[%c0_21, %c0_22, %c0_23], %40 {strides = array<i32>} : memref<1x4x1xf32, #tpu.memory_space<vmem>>, vector<1x4x1xf32>,
    %c0_24 = arith.constant 0 : index
    %c0_25 = arith.constant 0 : index
    %c0_26 = arith.constant 0 : index
    %41 = vector.load %arg3[%c0_24, %c0_25, %c0_26] : memref<1x4x128xf32, #tpu.memory_space<vmem>>, vector<1x4x128xf32>
    %42 = vector.shape_cast %41 : vector<1x4x128xf32> to vector<4x128xf32>
    %cst_27 = arith.constant dense<0.000000e+00> : vector<4xf32>
    %43 = vector.multi_reduction <add>, %42, %cst_27 [1] : vector<4x128xf32> to vector<4xf32>
    %44 = vector.shape_cast %43 : vector<4xf32> to vector<4x1xf32>
    %cst_28 = arith.constant 1.280000e+02 : f32
    %45 = vector.broadcast %cst_28 : f32 to vector<4x1xf32>
    %46 = arith.divf %44, %45 : vector<4x1xf32>
    %47 = vector.broadcast %46 : vector<4x1xf32> to vector<4x128xf32>
    %48 = arith.subf %42, %47 : vector<4x128xf32>
    %49 = arith.mulf %48, %48 : vector<4x128xf32>
    %cst_29 = arith.constant dense<0.000000e+00> : vector<4xf32>
    %50 = vector.multi_reduction <add>, %49, %cst_29 [1] : vector<4x128xf32> to vector<4xf32>
    %51 = vector.shape_cast %50 : vector<4xf32> to vector<4x1xf32>
    %c0_30 = arith.constant 0 : index
    %c0_31 = arith.constant 0 : index
    %c0_32 = arith.constant 0 : index
    %52 = vector.load %arg6[%c0_30, %c0_31, %c0_32] : memref<1x4x1xf32, #tpu.memory_space<vmem>>, vector<1x4x1xf32>
    %53 = vector.shape_cast %52 : vector<1x4x1xf32> to vector<4x1xf32>
    %54 = arith.subf %46, %53 : vector<4x1xf32>
    %c0_33 = arith.constant 0 : index
    %c0_34 = arith.constant 0 : index
    %c0_35 = arith.constant 0 : index
    %55 = vector.load %arg6[%c0_33, %c0_34, %c0_35] : memref<1x4x1xf32, #tpu.memory_space<vmem>>, vector<1x4x1xf32>
    %56 = vector.shape_cast %55 : vector<1x4x1xf32> to vector<4x1xf32>
    %57 = vector.broadcast %5 : f32 to vector<4x1xf32>
    %58 = arith.mulf %54, %57 : vector<4x1xf32>
    %59 = arith.addf %56, %58 : vector<4x1xf32>
    %c0_36 = arith.constant 0 : index
    %c0_37 = arith.constant 0 : index
    %c0_38 = arith.constant 0 : index
    %60 = vector.load %arg6[%c0_36, %c0_37, %c0_38] : memref<1x4x1xf32, #tpu.memory_space<vmem>>, vector<1x4x1xf32>
    %61 = vector.shape_cast %60 : vector<1x4x1xf32> to vector<4x1xf32>
    %62 = vector.shape_cast %59 : vector<4x1xf32> to vector<1x4x1xf32>
    tpu.vector_store %arg6[%c0_36, %c0_37, %c0_38], %62 {strides = array<i32>} : memref<1x4x1xf32, #tpu.memory_space<vmem>>, vector<1x4x1xf32>,
    %c0_39 = arith.constant 0 : index
    %c0_40 = arith.constant 0 : index
    %c0_41 = arith.constant 0 : index
    %63 = vector.load %arg7[%c0_39, %c0_40, %c0_41] : memref<1x4x1xf32, #tpu.memory_space<vmem>>, vector<1x4x1xf32>
    %64 = vector.shape_cast %63 : vector<1x4x1xf32> to vector<4x1xf32>
    %65 = arith.mulf %54, %54 : vector<4x1xf32>
    %66 = vector.broadcast %8 : f32 to vector<4x1xf32>
    %67 = arith.mulf %65, %66 : vector<4x1xf32>
    %68 = arith.addf %51, %67 : vector<4x1xf32>
    %69 = arith.addf %64, %68 : vector<4x1xf32>
    %c0_42 = arith.constant 0 : index
    %c0_43 = arith.constant 0 : index
    %c0_44 = arith.constant 0 : index
    %70 = vector.load %arg7[%c0_42, %c0_43, %c0_44] : memref<1x4x1xf32, #tpu.memory_space<vmem>>, vector<1x4x1xf32>
    %71 = vector.shape_cast %70 : vector<1x4x1xf32> to vector<4x1xf32>
    %72 = vector.shape_cast %69 : vector<4x1xf32> to vector<1x4x1xf32>
    tpu.vector_store %arg7[%c0_42, %c0_43, %c0_44], %72 {strides = array<i32>} : memref<1x4x1xf32, #tpu.memory_space<vmem>>, vector<1x4x1xf32>,
    %c1_i32 = arith.constant 1 : i32
    %73 = arith.cmpi eq, %arg1, %c1_i32 : i32
    %74 = arith.extui %73 : i1 to i32
    %c0_i32_45 = arith.constant 0 : i32
    %75 = arith.cmpi ne, %74, %c0_i32_45 : i32
    scf.if %75 {
      %c0_46 = arith.constant 0 : index
      %c0_47 = arith.constant 0 : index
      %c0_48 = arith.constant 0 : index
      %76 = vector.load %arg5[%c0_46, %c0_47, %c0_48] : memref<1x4x1xf32, #tpu.memory_space<vmem>>, vector<1x4x1xf32>
      %77 = vector.shape_cast %76 : vector<1x4x1xf32> to vector<4x1xf32>
      %cst_49 = arith.constant 2.550000e+02 : f32
      %78 = vector.broadcast %cst_49 : f32 to vector<4x1xf32>
      %79 = arith.divf %77, %78 : vector<4x1xf32>
      %cst_50 = arith.constant 9.99999974E-6 : f32
      %80 = vector.broadcast %cst_50 : f32 to vector<4x1xf32>
      %81 = arith.addf %79, %80 : vector<4x1xf32>
      %82 = math.rsqrt %81 : vector<4x1xf32>
      %c0_51 = arith.constant 0 : index
      %c0_52 = arith.constant 0 : index
      %c0_53 = arith.constant 0 : index
      %83 = vector.load %arg5[%c0_51, %c0_52, %c0_53] : memref<1x4x1xf32, #tpu.memory_space<vmem>>, vector<1x4x1xf32>
      %84 = vector.shape_cast %83 : vector<1x4x1xf32> to vector<4x1xf32>
      %85 = vector.shape_cast %82 : vector<4x1xf32> to vector<1x4x1xf32>
      tpu.vector_store %arg5[%c0_51, %c0_52, %c0_53], %85 {strides = array<i32>} : memref<1x4x1xf32, #tpu.memory_space<vmem>>, vector<1x4x1xf32>,
      %c0_54 = arith.constant 0 : index
      %c0_55 = arith.constant 0 : index
      %c0_56 = arith.constant 0 : index
      %86 = vector.load %arg7[%c0_54, %c0_55, %c0_56] : memref<1x4x1xf32, #tpu.memory_space<vmem>>, vector<1x4x1xf32>
      %87 = vector.shape_cast %86 : vector<1x4x1xf32> to vector<4x1xf32>
      %cst_57 = arith.constant 2.550000e+02 : f32
      %88 = vector.broadcast %cst_57 : f32 to vector<4x1xf32>
      %89 = arith.divf %87, %88 : vector<4x1xf32>
      %cst_58 = arith.constant 9.99999974E-6 : f32
      %90 = vector.broadcast %cst_58 : f32 to vector<4x1xf32>
      %91 = arith.addf %89, %90 : vector<4x1xf32>
      %92 = math.rsqrt %91 : vector<4x1xf32>
      %c0_59 = arith.constant 0 : index
      %c0_60 = arith.constant 0 : index
      %c0_61 = arith.constant 0 : index
      %93 = vector.load %arg7[%c0_59, %c0_60, %c0_61] : memref<1x4x1xf32, #tpu.memory_space<vmem>>, vector<1x4x1xf32>
      %94 = vector.shape_cast %93 : vector<1x4x1xf32> to vector<4x1xf32>
      %95 = vector.shape_cast %92 : vector<4x1xf32> to vector<1x4x1xf32>
      tpu.vector_store %arg7[%c0_59, %c0_60, %c0_61], %95 {strides = array<i32>} : memref<1x4x1xf32, #tpu.memory_space<vmem>>, vector<1x4x1xf32>,
    } else {
    }
    return
  }
  func.func @transform_0(%arg0: i32, %arg1: i32) -> (i32, i32, i32) {
    %c0_i32 = arith.constant 0 : i32
    %c0_i32_0 = arith.constant 0 : i32
    return %arg0, %c0_i32, %arg1 : i32, i32, i32
  }
  func.func @transform_1(%arg0: i32, %arg1: i32) -> (i32, i32, i32) {
    %c0_i32 = arith.constant 0 : i32
    %c0_i32_0 = arith.constant 0 : i32
    return %arg0, %c0_i32, %arg1 : i32, i32, i32
  }
  func.func @transform_2(%arg0: i32, %arg1: i32) -> (i32, i32, i32) {
    %c0_i32 = arith.constant 0 : i32
    %c0_i32_0 = arith.constant 0 : i32
    %c0_i32_1 = arith.constant 0 : i32
    return %arg0, %c0_i32, %c0_i32_0 : i32, i32, i32
  }
  func.func @transform_3(%arg0: i32, %arg1: i32) -> (i32, i32, i32) {
    %c0_i32 = arith.constant 0 : i32
    %c0_i32_0 = arith.constant 0 : i32
    %c0_i32_1 = arith.constant 0 : i32
    return %arg0, %c0_i32, %c0_i32_0 : i32, i32, i32
  }
  func.func @transform_4(%arg0: i32, %arg1: i32) -> (i32, i32, i32) {
    %c0_i32 = arith.constant 0 : i32
    %c0_i32_0 = arith.constant 0 : i32
    %c0_i32_1 = arith.constant 0 : i32
    return %arg0, %c0_i32, %c0_i32_0 : i32, i32, i32
  }
  func.func @transform_5(%arg0: i32, %arg1: i32) -> (i32, i32, i32) {
    %c0_i32 = arith.constant 0 : i32
    %c0_i32_0 = arith.constant 0 : i32
    %c0_i32_1 = arith.constant 0 : i32
    return %arg0, %c0_i32, %c0_i32_0 : i32, i32, i32
  }
}

</mosaic_0001>

<llo_original>
// kernel: tpu_custom_call.1
$region0: #{tpu_custom_call.1}
  #allocation0 [shape = 'u32[]', space=smem, size = 0x4, offset = 0x4, fixed_abs, tag = 'smem constant byte address 0x4 - core index']
  #allocation1 [shape = 'u32[144,128]{1,0:T(1,128)}', space=vmem, size = 0x12000, scoped, tag = 'internal scratch']
  %s0 = inlined_call_operand.hbm [shape: f32[2,4,256], index: 0, kind: input, shape index: {}]
  %s1 = inlined_call_operand.hbm [shape: f32[2,4,256], index: 1, kind: input, shape index: {}]
  %s2 = inlined_call_operand.vmem [shape: f32[2,4,1], index: 2, kind: output, shape index: {0}]
  %s3 = inlined_call_operand.vmem [shape: f32[2,4,1], index: 3, kind: output, shape index: {1}]
  %s4 = inlined_call_operand.vmem [shape: f32[2,4,1], index: 4, kind: output, shape index: {2}]
  %s5 = inlined_call_operand.vmem [shape: f32[2,4,1], index: 5, kind: output, shape index: {3}]
  %6 = xla_tuple %s2, %s3, %s4, %s5
  %s7 = sld [smem:[#allocation0]]
  $region81: #{tpu_custom_call.1} parent=0
    _
  %s9 = ssub.s32 1, %s7
  %s10 = scalar_select 0, %s9, %s7
  $region1: #{tpu_custom_call.1} parent=0
    #allocation2 [shape = 'u8[4096]{0}', space=vmem, size = 0x1000, scoped, tag = 'input window, operand 0']
    #allocation3 [shape = 's32[2]{0}', space=sflag, size = 0x8, scoped, tag = 'scoped memory for tpu_custom_call.1']
    #allocation4 [shape = 'u8[4096]{0}', space=vmem, size = 0x1000, scoped, tag = 'input window, operand 1']
    #allocation5 [shape = 's32[2]{0}', space=sflag, size = 0x8, scoped, tag = 'scoped memory for tpu_custom_call.1']
    %11 = vsyncpa [#allocation3], 0
    %s12 = scalar_lea.sflag [#allocation3], 1
    %13 = vsyncpa %s12, 0
    %14 = vsyncpa [#allocation5], 0
    %s15 = scalar_lea.sflag [#allocation5], 1
    %16 = vsyncpa %s15, 0
    loop: start=0, step=1, limit=6
    $region2: #{tpu_custom_call.1} parent=1 // loop_pre_header
      _
    $region3: #{tpu_custom_call.1} parent=1 // loop_header
      %s18 = sphi 0, %s22
      %p19 = scmp.ge.s32.totalorder %s18, 6
      %s25 = sphi 0, %s37
      %s26 = sphi 0, %s33
      %s27 = sphi 0, %s25
      %s28 = sphi 0, %s26
      %s29 = sphi 0, %s27
      %s30 = sphi 0, %s28
      %s42 = sphi 0, %s44
      %s45 = sphi 0, %s42
      %s46 = sphi 0, %s45
      %s62 = sphi 0, %s46
      %s70 = sphi 0, %s72
      %s73 = sphi 0, %s70
      %s74 = sphi 0, %s73
      %s90 = sphi 0, %s74
      %s96 = sphi 0, %s98
      %s99 = sphi 0, %s96
      %s100 = sphi 0, %s99
      %s116 = sphi 0, %s100
      %s122 = sphi 0, %s124
      %s125 = sphi 0, %s122
      %s126 = sphi 0, %s125
      %s142 = sphi 0, %s126
      %s148 = sphi 0, %s150
      %s151 = sphi 0, %s148
      %s152 = sphi 0, %s151
      %s168 = sphi 0, %s152
      %s174 = sphi 0, %s176
      %s177 = sphi 0, %s174
      %s178 = sphi 0, %s177
      %s194 = sphi 0, %s178
    $region4: #{tpu_custom_call.1} parent=1 // loop_header_branch
      %21 = sbr.rel (%p19) target = $region8
    $region5: #{tpu_custom_call.1} parent=1 // loop_body
      %s23 = ssub.s32 %s18, 1
      %s24 = ssub.s32 %s18, 2
      %s31 = sadd.s32 1, %s26
      %p32 = scmp.ge.s32.totalorder %s31, 2
      %s33 = scalar_select %p32, 0, %s31
      %s34 = sadd.s32 1, %s25
      %s35 = scalar_select %p32, %s34, %s25
      %p36 = scmp.ge.s32.totalorder %s35, 2
      %s37 = scalar_select %p36, 0, %s35
      %s38 = ssub.s32 %s25, %s37
      %s39 = ssub.s32 %s26, %s33
      %s40 = sor.u32 %s38, %s39
      %p41 = scmp.eq.s32.totalorder %s40, 0
      %s43 = sadd.s32 %s42, 1
      %s44 = scalar_select %p41, %s42, %s43
      %p47 = pneg %p41
      %p48 = scmp.eq.s32.totalorder %s18, 3
      %p49 = por %p47, %p48
      %p50 = scmp.ne.s32.totalorder %s42, %s45
      %p51 = scmp.eq.s32.totalorder %s18, 0
      %p52 = por %p50, %p51
      %p53 = scmp.ne.s32.totalorder %s42, %s45
      %p54 = scmp.eq.s32.totalorder %s23, 3
      %p55 = por %p53, %p54
      %p56 = scmp.ne.s32.totalorder %s45, %s46
      %p57 = scmp.eq.s32.totalorder %s23, 0
      %p58 = por %p56, %p57
      %p59 = scmp.ne.s32.totalorder %s45, %s46
      %p60 = scmp.eq.s32.totalorder %s24, 3
      %p61 = por %p59, %p60
      %p63 = scmp.ne.s32.totalorder %s46, %s62
      %p64 = scmp.eq.s32.totalorder %s24, 0
      %p65 = por %p63, %p64
      %s66 = ssub.s32 %s25, %s37
      %s67 = ssub.s32 %s26, %s33
      %s68 = sor.u32 %s66, %s67
      %p69 = scmp.eq.s32.totalorder %s68, 0
      %s71 = sadd.s32 %s70, 1
      %s72 = scalar_select %p69, %s70, %s71
      %p75 = pneg %p69
      %p76 = scmp.eq.s32.totalorder %s18, 3
      %p77 = por %p75, %p76
      %p78 = scmp.ne.s32.totalorder %s70, %s73
      %p79 = scmp.eq.s32.totalorder %s18, 0
      %p80 = por %p78, %p79
      %p81 = scmp.ne.s32.totalorder %s70, %s73
      %p82 = scmp.eq.s32.totalorder %s23, 3
      %p83 = por %p81, %p82
      %p84 = scmp.ne.s32.totalorder %s73, %s74
      %p85 = scmp.eq.s32.totalorder %s23, 0
      %p86 = por %p84, %p85
      %p87 = scmp.ne.s32.totalorder %s73, %s74
      %p88 = scmp.eq.s32.totalorder %s24, 3
      %p89 = por %p87, %p88
      %p91 = scmp.ne.s32.totalorder %s74, %s90
      %p92 = scmp.eq.s32.totalorder %s24, 0
      %p93 = por %p91, %p92
      %s94 = ssub.s32 %s25, %s37
      %p95 = scmp.eq.s32.totalorder %s94, 0
      %s97 = sadd.s32 %s96, 1
      %s98 = scalar_select %p95, %s96, %s97
      %p101 = pneg %p95
      %p102 = scmp.eq.s32.totalorder %s18, 3
      %p103 = por %p101, %p102
      %p104 = scmp.ne.s32.totalorder %s96, %s99
      %p105 = scmp.eq.s32.totalorder %s18, 0
      %p106 = por %p104, %p105
      %p107 = scmp.ne.s32.totalorder %s96, %s99
      %p108 = scmp.eq.s32.totalorder %s23, 3
      %p109 = por %p107, %p108
      %p110 = scmp.ne.s32.totalorder %s99, %s100
      %p111 = scmp.eq.s32.totalorder %s23, 0
      %p112 = por %p110, %p111
      %p113 = scmp.ne.s32.totalorder %s99, %s100
      %p114 = scmp.eq.s32.totalorder %s24, 3
      %p115 = por %p113, %p114
      %p117 = scmp.ne.s32.totalorder %s100, %s116
      %p118 = scmp.eq.s32.totalorder %s24, 0
      %p119 = por %p117, %p118
      %s120 = ssub.s32 %s25, %s37
      %p121 = scmp.eq.s32.totalorder %s120, 0
      %s123 = sadd.s32 %s122, 1
      %s124 = scalar_select %p121, %s122, %s123
      %p127 = pneg %p121
      %p128 = scmp.eq.s32.totalorder %s18, 3
      %p129 = por %p127, %p128
      %p130 = scmp.ne.s32.totalorder %s122, %s125
      %p131 = scmp.eq.s32.totalorder %s18, 0
      %p132 = por %p130, %p131
      %p133 = scmp.ne.s32.totalorder %s122, %s125
      %p134 = scmp.eq.s32.totalorder %s23, 3
      %p135 = por %p133, %p134
      %p136 = scmp.ne.s32.totalorder %s125, %s126
      %p137 = scmp.eq.s32.totalorder %s23, 0
      %p138 = por %p136, %p137
      %p139 = scmp.ne.s32.totalorder %s125, %s126
      %p140 = scmp.eq.s32.totalorder %s24, 3
      %p141 = por %p139, %p140
      %p143 = scmp.ne.s32.totalorder %s126, %s142
      %p144 = scmp.eq.s32.totalorder %s24, 0
      %p145 = por %p143, %p144
      %s146 = ssub.s32 %s25, %s37
      %p147 = scmp.eq.s32.totalorder %s146, 0
      %s149 = sadd.s32 %s148, 1
      %s150 = scalar_select %p147, %s148, %s149
      %p153 = pneg %p147
      %p154 = scmp.eq.s32.totalorder %s18, 3
      %p155 = por %p153, %p154
      %p156 = scmp.ne.s32.totalorder %s148, %s151
      %p157 = scmp.eq.s32.totalorder %s18, 0
      %p158 = por %p156, %p157
      %p159 = scmp.ne.s32.totalorder %s148, %s151
      %p160 = scmp.eq.s32.totalorder %s23, 3
      %p161 = por %p159, %p160
      %p162 = scmp.ne.s32.totalorder %s151, %s152
      %p163 = scmp.eq.s32.totalorder %s23, 0
      %p164 = por %p162, %p163
      %p165 = scmp.ne.s32.totalorder %s151, %s152
      %p166 = scmp.eq.s32.totalorder %s24, 3
      %p167 = por %p165, %p166
      %p169 = scmp.ne.s32.totalorder %s152, %s168
      %p170 = scmp.eq.s32.totalorder %s24, 0
      %p171 = por %p169, %p170
      %s172 = ssub.s32 %s25, %s37
      %p173 = scmp.eq.s32.totalorder %s172, 0
      %s175 = sadd.s32 %s174, 1
      %s176 = scalar_select %p173, %s174, %s175
      %p179 = pneg %p173
      %p180 = scmp.eq.s32.totalorder %s18, 3
      %p181 = por %p179, %p180
      %p182 = scmp.ne.s32.totalorder %s174, %s177
      %p183 = scmp.eq.s32.totalorder %s18, 0
      %p184 = por %p182, %p183
      %p185 = scmp.ne.s32.totalorder %s174, %s177
      %p186 = scmp.eq.s32.totalorder %s23, 3
      %p187 = por %p185, %p186
      %p188 = scmp.ne.s32.totalorder %s177, %s178
      %p189 = scmp.eq.s32.totalorder %s23, 0
      %p190 = por %p188, %p189
      %p191 = scmp.ne.s32.totalorder %s177, %s178
      %p192 = scmp.eq.s32.totalorder %s24, 3
      %p193 = por %p191, %p192
      %p195 = scmp.ne.s32.totalorder %s178, %s194
      %p196 = scmp.eq.s32.totalorder %s24, 0
      %p197 = por %p195, %p196
      %p198 = scmp.le.s32.totalorder 1, %s18
      %p199 = scmp.lt.s32.totalorder %s18, 5
      %p200 = pnand %p198, %p199
      %p201 = pneg %p200
      // Predicated region
      $region9: #{tpu_custom_call.1} parent=5 // pred_check
        _
      $region10: #{tpu_custom_call.1} parent=5 // pred_check_branch
        %203 = sbr.rel (%p200) target = $region12
      $region11: #{tpu_custom_call.1} parent=5 // pred_region
        %s204 = ssub.s32 %s18, 1
      $region12: #{tpu_custom_call.1} parent=5 // pred_fallthru
        _
      %p205 = scmp.lt.s32.totalorder %s18, 4
      // Predicated region
      $region13: #{tpu_custom_call.1} parent=5 // pred_check
        %p206 = pneg %p205
      $region14: #{tpu_custom_call.1} parent=5 // pred_check_branch
        %208 = sbr.rel (%p206) target = $region16
      $region15: #{tpu_custom_call.1} parent=5 // pred_region
        // Predicated region
        $region17: #{tpu_custom_call.1} parent=15 // pred_check
          %p209 = pneg %p52
        $region18: #{tpu_custom_call.1} parent=15 // pred_check_branch
          %211 = sbr.rel (%p209) target = $region20
        $region19: #{tpu_custom_call.1} parent=15 // pred_region
          %s212 = sand.u32 %s42, 1
          %s213 = scalar_lea.sflag [#allocation3], %s212
          %s214 = sand.u32 %s42, 1
          %s215 = smul.addr %s214, 4
          %s216 = scalar_lea.vmem [#allocation2], %s215
          %s218 = ssub.s32 64, 64
          %219 = vsyncadd %s213, %s218
          %s220 = smul.addr %s25, 2
          %s221 = sadd.s32 %s26, %s220
          %s222 = smul.addr %s221, 64
          %s223 = scalar_lea.hbm %s0, %s222
          %s225 = sshll.u32 %s216, 4
          %s226 = int_to_ptr.vmem [resolvable:$true] %s225
          %228 = dma.hbm_to_vmem [thread:$0]  %s223, 64, %s226, %s213
        $region20: #{tpu_custom_call.1} parent=15 // pred_fallthru
          _
        // Predicated region
        $region21: #{tpu_custom_call.1} parent=15 // pred_check
          %p229 = pneg %p80
        $region22: #{tpu_custom_call.1} parent=15 // pred_check_branch
          %231 = sbr.rel (%p229) target = $region24
        $region23: #{tpu_custom_call.1} parent=15 // pred_region
          %s232 = sand.u32 %s70, 1
          %s233 = scalar_lea.sflag [#allocation5], %s232
          %s234 = sand.u32 %s70, 1
          %s235 = smul.addr %s234, 4
          %s236 = scalar_lea.vmem [#allocation4], %s235
          %s238 = ssub.s32 64, 64
          %239 = vsyncadd %s233, %s238
          %s240 = smul.addr %s25, 2
          %s241 = sadd.s32 %s26, %s240
          %s242 = smul.addr %s241, 64
          %s243 = scalar_lea.hbm %s1, %s242
          %s245 = sshll.u32 %s236, 4
          %s246 = int_to_ptr.vmem [resolvable:$true] %s245
          %248 = dma.hbm_to_vmem [thread:$0]  %s243, 64, %s246, %s233
        $region24: #{tpu_custom_call.1} parent=15 // pred_fallthru
          _
      $region16: #{tpu_custom_call.1} parent=5 // pred_fallthru
        _
      %p249 = scmp.le.s32.totalorder 1, %s18
      %p250 = scmp.lt.s32.totalorder %s18, 5
      %p251 = pnand %p249, %p250
      %p252 = pneg %p251
      // Predicated region
      $region25: #{tpu_custom_call.1} parent=5 // pred_check
        _
      $region26: #{tpu_custom_call.1} parent=5 // pred_check_branch
        %254 = sbr.rel (%p251) target = $region28
      $region27: #{tpu_custom_call.1} parent=5 // pred_region
        %s255 = ssub.s32 %s18, 1
        %s256 = sand.u32 %s45, 1
        %s257 = scalar_lea.sflag [#allocation3], %s256
        %s258 = sand.u32 %s45, 1
        %s259 = smul.addr %s258, 4
        %s260 = scalar_lea.vmem [#allocation2], %s259
        // Predicated region
        $region29: #{tpu_custom_call.1} parent=27 // pred_check
          %p261 = pneg %p58
        $region30: #{tpu_custom_call.1} parent=27 // pred_check_branch
          %263 = sbr.rel (%p261) target = $region32
        $region31: #{tpu_custom_call.1} parent=27 // pred_region
          %264 = dma.done %s257, 64
        $region32: #{tpu_custom_call.1} parent=27 // pred_fallthru
          _
        %s265 = sand.u32 %s73, 1
        %s266 = scalar_lea.sflag [#allocation5], %s265
        %s267 = sand.u32 %s73, 1
        %s268 = smul.addr %s267, 4
        %s269 = scalar_lea.vmem [#allocation4], %s268
        // Predicated region
        $region33: #{tpu_custom_call.1} parent=27 // pred_check
          %p270 = pneg %p86
        $region34: #{tpu_custom_call.1} parent=27 // pred_check_branch
          %272 = sbr.rel (%p270) target = $region36
        $region35: #{tpu_custom_call.1} parent=27 // pred_region
          %273 = dma.done %s266, 64
        $region36: #{tpu_custom_call.1} parent=27 // pred_fallthru
          _
        %s274 = sand.u32 %s45, 1
        %s275 = scalar_lea.sflag [#allocation3], %s274
        %s276 = sand.u32 %s45, 1
        %s277 = smul.addr %s276, 4
        %s278 = scalar_lea.vmem [#allocation2], %s277
        %p279 = pneg %p58
        %p280 = pneg %p55
        %s281 = sand.u32 %s73, 1
        %s282 = scalar_lea.sflag [#allocation5], %s281
        %s283 = sand.u32 %s73, 1
        %s284 = smul.addr %s283, 4
        %s285 = scalar_lea.vmem [#allocation4], %s284
        %p286 = pneg %p86
        %p287 = pneg %p83
        %p288 = pneg %p112
        %p289 = pneg %p109
        %p290 = scmp.lt.s32.totalorder %s27, 1
        %s291 = scalar_select %p290, %s27, 1
        %s292 = smul.addr %s291, 4
        %s293 = scalar_lea.vmem %s2, %s292
        %p294 = pneg %p138
        %p295 = pneg %p135
        %p296 = scmp.lt.s32.totalorder %s27, 1
        %s297 = scalar_select %p296, %s27, 1
        %s298 = smul.addr %s297, 4
        %s299 = scalar_lea.vmem %s3, %s298
        %p300 = pneg %p164
        %p301 = pneg %p161
        %p302 = scmp.lt.s32.totalorder %s27, 1
        %s303 = scalar_select %p302, %s27, 1
        %s304 = smul.addr %s303, 4
        %s305 = scalar_lea.vmem %s4, %s304
        %p306 = pneg %p190
        %p307 = pneg %p187
        %p308 = scmp.lt.s32.totalorder %s27, 1
        %s309 = scalar_select %p308, %s27, 1
        %s310 = smul.addr %s309, 4
        %s311 = scalar_lea.vmem %s5, %s310
        %p312 = scmp.lt.s32.totalorder %s27, 1
        %s313 = scalar_select %p312, %s27, 1
        %s314 = smul.addr %s313, 4
        %s315 = scalar_lea.vmem %s2, %s314
        %p316 = scmp.lt.s32.totalorder %s27, 1
        %s317 = scalar_select %p316, %s27, 1
        %s318 = smul.addr %s317, 4
        %s319 = scalar_lea.vmem %s3, %s318
        %p320 = scmp.lt.s32.totalorder %s27, 1
        %s321 = scalar_select %p320, %s27, 1
        %s322 = smul.addr %s321, 4
        %s323 = scalar_lea.vmem %s4, %s322
        %p324 = scmp.lt.s32.totalorder %s27, 1
        %s325 = scalar_select %p324, %s27, 1
        %s326 = smul.addr %s325, 4
        %s327 = scalar_lea.vmem %s5, %s326
        %p328 = scmp.eq.s32.totalorder %s28, 0
        // Predicated region
        $region37: #{tpu_custom_call.1} parent=27 // pred_check
          %p329 = pneg %p328
        $region38: #{tpu_custom_call.1} parent=27 // pred_check_branch
          %331 = sbr.rel (%p329) target = $region40
        $region39: #{tpu_custom_call.1} parent=27 // pred_region
          %vm332 = vcmask 3072
          %333 = vst.msk [vmem:[%s315] sm:$0xf] %vm332, 0.0
          %334 = vst.msk [vmem:[%s319] sm:$0xf] %vm332, 0.0
          %335 = vst.msk [vmem:[%s323] sm:$0xf] %vm332, 0.0
          %336 = vst.msk [vmem:[%s327] sm:$0xf] %vm332, 0.0
        $region40: #{tpu_custom_call.1} parent=27 // pred_fallthru
          _
        %s337 = scvt.s32.f32 %s28
        %s338 = sadd.f32 %s337, 1.0
        %v339 = vstv %s338
        %v340 = vrcp.pop %v339
        %s341 = vtos %v340
        %s342 = smul.f32 %s337, 128.0
        %v343 = vstv %s338
        %v344 = vrcp.pop %v343
        %s345 = vtos %v344
        %s346 = smul.f32 %s342, %s345
        %v347 = vld [vmem:[%s260] sm:$0xf]
        %vm348 = vcmask 1043456
        %v349 = vsel %vm348, %v347, 0.0
        %350 = vadd.xlane.f32.xlu0 %v349
        %v351 = vpop.xlane.xlu0 %350
        %v352 = vrcp.pop 128.0
        %v353 = vmul.f32 %v351, %v352
        %v354 = vsub.f32 %v347, %v353
        %v355 = vmul.f32 %v354, %v354
        %v356 = vsel %vm348, %v355, 0.0
        %357 = vadd.xlane.f32.xlu0 %v356
        %v358 = vpop.xlane.xlu0 %357
        %v359 = vld [vmem:[%s315] sm:$0xf]
        %v360 = vsub.f32 %v353, %v359
        %v361 = vstv %s341
        %v362 = vmul.f32 %v360, %v361
        %v363 = vadd.f32 %v359, %v362
        %vm364 = vcmask 3072
        %365 = vst.msk [vmem:[%s315] sm:$0xf] %vm364, %v363
        %v366 = vld [vmem:[%s319] sm:$0xf]
        %v367 = vmul.f32 %v360, %v360
        %v368 = vstv %s346
        %v369 = vmul.f32 %v367, %v368
        %v370 = vadd.f32 %v358, %v369
        %v371 = vadd.f32 %v366, %v370
        %372 = vst.msk [vmem:[%s319] sm:$0xf] %vm364, %v371
        %v373 = vld [vmem:[%s269] sm:$0xf]
        %v374 = vsel %vm348, %v373, 0.0
        %375 = vadd.xlane.f32.xlu0 %v374
        %v376 = vpop.xlane.xlu0 %375
        %v377 = vmul.f32 %v376, %v352
        %v378 = vsub.f32 %v373, %v377
        %v379 = vmul.f32 %v378, %v378
        %v380 = vsel %vm348, %v379, 0.0
        %381 = vadd.xlane.f32.xlu0 %v380
        %v382 = vpop.xlane.xlu0 %381
        %v383 = vld [vmem:[%s323] sm:$0xf]
        %v384 = vsub.f32 %v377, %v383
        %v385 = vmul.f32 %v384, %v361
        %v386 = vadd.f32 %v383, %v385
        %387 = vst.msk [vmem:[%s323] sm:$0xf] %vm364, %v386
        %v388 = vld [vmem:[%s327] sm:$0xf]
        %v389 = vmul.f32 %v384, %v384
        %v390 = vmul.f32 %v389, %v368
        %v391 = vadd.f32 %v382, %v390
        %v392 = vadd.f32 %v388, %v391
        %393 = vst.msk [vmem:[%s327] sm:$0xf] %vm364, %v392
        %p394 = scmp.eq.s32.totalorder %s28, 1
        // Predicated region
        $region41: #{tpu_custom_call.1} parent=27 // pred_check
          %p395 = pneg %p394
        $region42: #{tpu_custom_call.1} parent=27 // pred_check_branch
          %397 = sbr.rel (%p395) target = $region44
        $region43: #{tpu_custom_call.1} parent=27 // pred_region
          %v398 = vld [vmem:[%s319] sm:$0xf]
          %v399 = vrcp.pop 255.0
          %v400 = vmul.f32 %v398, %v399
          %v401 = vadd.f32 %v400, 1e-05
          %v402 = vrsqrt.pop %v401
          %403 = vst.msk [vmem:[%s319] sm:$0xf] %vm364, %v402
          %v404 = vld [vmem:[%s327] sm:$0xf]
          %v405 = vmul.f32 %v404, %v399
          %v406 = vadd.f32 %v405, 1e-05
          %v407 = vrsqrt.pop %v406
          %408 = vst.msk [vmem:[%s327] sm:$0xf] %vm364, %v407
        $region44: #{tpu_custom_call.1} parent=27 // pred_fallthru
          _
        %p409 = scmp.lt.s32.totalorder %s27, 1
        %s410 = scalar_select %p409, %s27, 1
        %s411 = smul.addr %s410, 4
        %s412 = scalar_lea.vmem %s2, %s411
        %p413 = scmp.lt.s32.totalorder %s27, 1
        %s414 = scalar_select %p413, %s27, 1
        %s415 = smul.addr %s414, 4
        %s416 = scalar_lea.vmem %s3, %s415
        %p417 = scmp.lt.s32.totalorder %s27, 1
        %s418 = scalar_select %p417, %s27, 1
        %s419 = smul.addr %s418, 4
        %s420 = scalar_lea.vmem %s4, %s419
        %p421 = scmp.lt.s32.totalorder %s27, 1
        %s422 = scalar_select %p421, %s27, 1
        %s423 = smul.addr %s422, 4
        %s424 = scalar_lea.vmem %s5, %s423
        // Predicated region
        $region45: #{tpu_custom_call.1} parent=27 // pred_check
          %p425 = pneg %p109
        $region46: #{tpu_custom_call.1} parent=27 // pred_check_branch
          %427 = sbr.rel (%p425) target = $region48
        $region47: #{tpu_custom_call.1} parent=27 // pred_region
          _
        $region48: #{tpu_custom_call.1} parent=27 // pred_fallthru
          _
        // Predicated region
        $region49: #{tpu_custom_call.1} parent=27 // pred_check
          %p428 = pneg %p135
        $region50: #{tpu_custom_call.1} parent=27 // pred_check_branch
          %430 = sbr.rel (%p428) target = $region52
        $region51: #{tpu_custom_call.1} parent=27 // pred_region
          _
        $region52: #{tpu_custom_call.1} parent=27 // pred_fallthru
          _
        // Predicated region
        $region53: #{tpu_custom_call.1} parent=27 // pred_check
          %p431 = pneg %p161
        $region54: #{tpu_custom_call.1} parent=27 // pred_check_branch
          %433 = sbr.rel (%p431) target = $region56
        $region55: #{tpu_custom_call.1} parent=27 // pred_region
          _
        $region56: #{tpu_custom_call.1} parent=27 // pred_fallthru
          _
        // Predicated region
        $region57: #{tpu_custom_call.1} parent=27 // pred_check
          %p434 = pneg %p187
        $region58: #{tpu_custom_call.1} parent=27 // pred_check_branch
          %436 = sbr.rel (%p434) target = $region60
        $region59: #{tpu_custom_call.1} parent=27 // pred_region
          _
        $region60: #{tpu_custom_call.1} parent=27 // pred_fallthru
          _
      $region28: #{tpu_custom_call.1} parent=5 // pred_fallthru
        _
      %p437 = scmp.le.s32.totalorder 2, %s18
      // Predicated region
      $region61: #{tpu_custom_call.1} parent=5 // pred_check
        %p438 = pneg %p437
      $region62: #{tpu_custom_call.1} parent=5 // pred_check_branch
        %440 = sbr.rel (%p438) target = $region64
      $region63: #{tpu_custom_call.1} parent=5 // pred_region
        %s441 = ssub.s32 %s18, 2
        // Predicated region
        $region65: #{tpu_custom_call.1} parent=63 // pred_check
          %p442 = pneg %p115
        $region66: #{tpu_custom_call.1} parent=63 // pred_check_branch
          %444 = sbr.rel (%p442) target = $region68
        $region67: #{tpu_custom_call.1} parent=63 // pred_region
          %p445 = scmp.lt.s32.totalorder %s29, 1
          %s446 = scalar_select %p445, %s29, 1
          %s447 = smul.addr %s446, 4
          %s448 = scalar_lea.vmem %s2, %s447
        $region68: #{tpu_custom_call.1} parent=63 // pred_fallthru
          _
        // Predicated region
        $region69: #{tpu_custom_call.1} parent=63 // pred_check
          %p449 = pneg %p141
        $region70: #{tpu_custom_call.1} parent=63 // pred_check_branch
          %451 = sbr.rel (%p449) target = $region72
        $region71: #{tpu_custom_call.1} parent=63 // pred_region
          %p452 = scmp.lt.s32.totalorder %s29, 1
          %s453 = scalar_select %p452, %s29, 1
          %s454 = smul.addr %s453, 4
          %s455 = scalar_lea.vmem %s3, %s454
        $region72: #{tpu_custom_call.1} parent=63 // pred_fallthru
          _
        // Predicated region
        $region73: #{tpu_custom_call.1} parent=63 // pred_check
          %p456 = pneg %p167
        $region74: #{tpu_custom_call.1} parent=63 // pred_check_branch
          %458 = sbr.rel (%p456) target = $region76
        $region75: #{tpu_custom_call.1} parent=63 // pred_region
          %p459 = scmp.lt.s32.totalorder %s29, 1
          %s460 = scalar_select %p459, %s29, 1
          %s461 = smul.addr %s460, 4
          %s462 = scalar_lea.vmem %s4, %s461
        $region76: #{tpu_custom_call.1} parent=63 // pred_fallthru
          _
        // Predicated region
        $region77: #{tpu_custom_call.1} parent=63 // pred_check
          %p463 = pneg %p193
        $region78: #{tpu_custom_call.1} parent=63 // pred_check_branch
          %465 = sbr.rel (%p463) target = $region80
        $region79: #{tpu_custom_call.1} parent=63 // pred_region
          %p466 = scmp.lt.s32.totalorder %s29, 1
          %s467 = scalar_select %p466, %s29, 1
          %s468 = smul.addr %s467, 4
          %s469 = scalar_lea.vmem %s5, %s468
        $region80: #{tpu_custom_call.1} parent=63 // pred_fallthru
          _
      $region64: #{tpu_custom_call.1} parent=5 // pred_fallthru
        _
    $region6: #{tpu_custom_call.1} parent=1 // loop_footer
      %s22 = sadd.s32 1, %s18
    $region7: #{tpu_custom_call.1} parent=1 // loop_footer_branch
      %17 = sbr.rel target = $region3
    $region8: #{tpu_custom_call.1} parent=1 // loop_exit
      _
    %470 = vsyncpa [#allocation3], 1
    %s471 = scalar_lea.sflag [#allocation3], 1
    %472 = vsyncpa %s471, 1
    %473 = vsyncpa [#allocation5], 1
    %s474 = scalar_lea.sflag [#allocation5], 1
    %475 = vsyncpa %s474, 1

</llo_original>
